<compile_context>
chip_gen: v5e
topology: v5e:2x2
jax: 0.10.0
libtpu: 0.0.40
codegen_flags: <defaults>
</compile_context>

<pallas_src>
import jax
import jax.numpy as jnp
from jax import lax
from jax.experimental import pallas as pl
from jax.experimental.pallas import tpu as pltpu

GROWTH_RATE = 32
BLOCK_CONFIG = (6, 12, 24, 16)          # densenet121
NUM_INIT_FEATURES = 64
BN_SIZE = 4

VMEM_LIMIT_BYTES = 32 * 1024 * 1024     # safe on v5e/v6e (128 MiB) and v7x (64 MiB)


def _round_up(x, m):
    return (x + m - 1) // m * m


# ---------------------------------------------------------------------------
# Kernel 1: tiled MXU matmul with fused (optional) BN+ReLU pre-op / post-op
# ---------------------------------------------------------------------------
def _make_mm_kernel(has_pre, has_post):
    def kernel(*refs):
        a_ref, w_ref = refs[0], refs[1]
        idx = 2
        if has_pre:
            ps_ref, pb_ref = refs[idx], refs[idx + 1]
            idx += 2
        if has_post:
            qs_ref, qb_ref = refs[idx], refs[idx + 1]
            idx += 2
        o_ref, acc_ref = refs[idx], refs[idx + 1]

        k = pl.program_id(2)

        @pl.when(k == 0)
        def _init():
            acc_ref[...] = jnp.zeros_like(acc_ref)

        a = a_ref[...]
        if has_pre:
            # folded eval-mode BN (per input channel) + ReLU, f32 on the VPU,
            # bf16 only for the MXU operand.
            a = jnp.maximum(a.astype(jnp.float32) * ps_ref[...] + pb_ref[...],
                            0.0).astype(jnp.bfloat16)
        acc_ref[...] += jnp.dot(a, w_ref[...],
                                preferred_element_type=jnp.float32)

        @pl.when(k == pl.num_programs(2) - 1)
        def _finalize():
            r = acc_ref[...]
            if has_post:
                # folded eval-mode BN (per output channel) + ReLU
                r = jnp.maximum(r * qs_ref[...] + qb_ref[...], 0.0)
            o_ref[...] = r.astype(o_ref.dtype)

    return kernel


def fused_matmul(a, w, pre=None, post=None, out_dtype=jnp.bfloat16):
    """(M,K)@(K,N) on the MXU, bf16 operands, f32 VMEM accumulator.

    pre  = (scale, bias), each (1, K): ReLU(a*scale+bias) applied to LHS tiles.
    post = (scale, bias), each (1, N): ReLU(acc*scale+bias) applied on store.
    """
    m, k = a.shape
    k2, n = w.shape
    assert k == k2
    tm = 256 if m >= 256 else _round_up(m, 8)
    tn = 128                                  # lane-dense output on every gen
    tk = 512 if (k % 512 == 0) else k         # full-K block otherwise
    mp, kp, np_ = _round_up(m, tm), _round_up(k, tk), _round_up(n, tn)

    a = a.astype(jnp.bfloat16)
    w = w.astype(jnp.bfloat16)
    if mp > m or kp > k:
        a = jnp.pad(a, ((0, mp - m), (0, kp - k)))
    if kp > k or np_ > n:
        w = jnp.pad(w, ((0, kp - k), (0, np_ - n)))

    inputs = [a, w]
    in_specs = [pl.BlockSpec((tm, tk), lambda i, j, kk: (i, kk)),
                pl.BlockSpec((tk, tn), lambda i, j, kk: (kk, j))]
    if pre is not None:
        ps, pb = pre
        ps = ps.astype(jnp.float32)
        pb = pb.astype(jnp.float32)
        if kp > k:
            ps = jnp.pad(ps, ((0, 0), (0, kp - k)))
            pb = jnp.pad(pb, ((0, 0), (0, kp - k)))
        inputs += [ps, pb]
        in_specs += [pl.BlockSpec((1, tk), lambda i, j, kk: (0, kk)),
                     pl.BlockSpec((1, tk), lambda i, j, kk: (0, kk))]
    if post is not None:
        qs, qb = post
        qs = qs.astype(jnp.float32)
        qb = qb.astype(jnp.float32)
        if np_ > n:
            qs = jnp.pad(qs, ((0, 0), (0, np_ - n)))
            qb = jnp.pad(qb, ((0, 0), (0, np_ - n)))
        inputs += [qs, qb]
        in_specs += [pl.BlockSpec((1, tn), lambda i, j, kk: (0, j)),
                     pl.BlockSpec((1, tn), lambda i, j, kk: (0, j))]

    out = pl.pallas_call(
        _make_mm_kernel(pre is not None, post is not None),
        grid=(mp // tm, np_ // tn, kp // tk),
        in_specs=in_specs,
        out_specs=pl.BlockSpec((tm, tn), lambda i, j, kk: (i, j)),
        out_shape=jax.ShapeDtypeStruct((mp, np_), out_dtype),
        scratch_shapes=[pltpu.VMEM((tm, tn), jnp.float32)],
        compiler_params=pltpu.CompilerParams(
            dimension_semantics=("parallel", "parallel", "arbitrary"),
            vmem_limit_bytes=VMEM_LIMIT_BYTES),
        cost_estimate=pl.CostEstimate(
            flops=2 * mp * kp * np_,
            transcendentals=0,
            bytes_accessed=2 * (mp * kp + kp * np_ + mp * np_)),
    )(*inputs)
    if mp > m or np_ > n:
        out = out[:m, :n]
    return out


# ---------------------------------------------------------------------------
# Kernel 2: direct 3x3 conv (stride 1, pad 1) -- no im2col materialization
# ---------------------------------------------------------------------------
def _make_conv3x3_kernel(wpad, hw2):
    def kernel(x_ref, w_ref, o_ref, acc_ref):
        acc_ref[...] = jnp.zeros_like(acc_ref)
        # 9 shifted matmuls over the row-major-flattened, zero-padded image.
        for di in range(3):
            for dj in range(3):
                s = di * wpad + dj
                acc_ref[...] += jnp.dot(
                    x_ref[0, pl.ds(s, hw2), :], w_ref[3 * di + dj],
                    preferred_element_type=jnp.float32)
        o_ref[0] = acc_ref[...].astype(o_ref.dtype)

    return kernel


def conv3x3_direct(x, w):
    """3x3 / stride 1 / pad 1 conv on (already activated) NHWC bf16 input."""
    n, h, ww, cin = x.shape
    kh, kw, cin2, cout = w.shape
    assert (kh, kw) == (3, 3) and cin2 == cin
    cout_p = _round_up(cout, 128)            # lane-dense stores; slice later
    wp = w.astype(jnp.bfloat16)
    if cout_p > cout:
        wp = jnp.pad(wp, ((0, 0), (0, 0), (0, 0), (0, cout_p - cout)))
    wr = wp.reshape(9, cin, cout_p)

    wpad = ww + 2
    hw2 = h * wpad                           # rows of the (width-padded) output
    rows = (h + 2) * wpad
    length = _round_up(rows + 2, 8)          # room for the largest shift
    xp = jnp.pad(x.astype(jnp.bfloat16), ((0, 0), (1, 1), (1, 1), (0, 0)))
    xf = jnp.pad(xp.reshape(n, rows, cin), ((0, 0), (0, length - rows), (0, 0)))

    out = pl.pallas_call(
        _make_conv3x3_kernel(wpad, hw2),
        grid=(n,),
        in_specs=[pl.BlockSpec((1, length, cin), lambda i: (i, 0, 0)),
                  pl.BlockSpec((9, cin, cout_p), lambda i: (0, 0, 0))],
        out_specs=pl.BlockSpec((1, hw2, cout_p), lambda i: (i, 0, 0)),
        out_shape=jax.ShapeDtypeStruct((n, hw2, cout_p), jnp.bfloat16),
        scratch_shapes=[pltpu.VMEM((hw2, cout_p), jnp.float32)],
        compiler_params=pltpu.CompilerParams(
            dimension_semantics=("parallel",),
            vmem_limit_bytes=VMEM_LIMIT_BYTES),
        cost_estimate=pl.CostEstimate(
            flops=2 * 9 * n * hw2 * cin * cout_p,
            transcendentals=0,
            bytes_accessed=2 * n * (length * cin + hw2 * cout_p)
            + 2 * 9 * cin * cout_p),
    )(xf, wr)
    # drop the width-pad garbage columns and the lane padding
    return out.reshape(n, h, wpad, cout_p)[:, :, :ww, :cout]


# ---------------------------------------------------------------------------
# Kernel 3: norm5 + relu + adaptive_avg_pool2d((1,1)) + flatten (fused)
# ---------------------------------------------------------------------------
def _bn_relu_gap_kernel(x_ref, s_ref, b_ref, o_ref):
    x = jnp.maximum(x_ref[...].astype(jnp.float32) * s_ref[...] + b_ref[...],
                    0.0)                                   # (N, HW, C)
    o_ref[...] = jnp.mean(x, axis=1)                       # (N, C)


def bn_relu_global_avg_pool(x, scale, bias):
    n, h, w, c = x.shape
    xr = x.reshape(n, h * w, c)
    s3 = scale.reshape(1, 1, c).astype(jnp.float32)
    b3 = bias.reshape(1, 1, c).astype(jnp.float32)
    return pl.pallas_call(
        _bn_relu_gap_kernel,
        grid=(1,),
        in_specs=[pl.BlockSpec((n, h * w, c), lambda i: (0, 0, 0)),
                  pl.BlockSpec((1, 1, c), lambda i: (0, 0, 0)),
                  pl.BlockSpec((1, 1, c), lambda i: (0, 0, 0))],
        out_specs=pl.BlockSpec((n, c), lambda i: (0, 0)),
        out_shape=jax.ShapeDtypeStruct((n, c), jnp.float32),
        compiler_params=pltpu.CompilerParams(
            dimension_semantics=("arbitrary",),
            vmem_limit_bytes=VMEM_LIMIT_BYTES),
    )(xr, s3, b3)


# ---------------------------------------------------------------------------
# Glue: im2col for the single 7x7 stem conv, pooling
# ---------------------------------------------------------------------------
def _im2col(x, kh, kw, stride, pad):
    n, h, w, c = x.shape
    if pad:
        x = jnp.pad(x, ((0, 0), (pad, pad), (pad, pad), (0, 0)))
    ho = (h + 2 * pad - kh) // stride + 1
    wo = (w + 2 * pad - kw) // stride + 1
    cols = []
    for i in range(kh):
        for j in range(kw):
            cols.append(lax.slice(
                x, (0, i, j, 0),
                (n, i + (ho - 1) * stride + 1, j + (wo - 1) * stride + 1, c),
                (1, stride, stride, 1)))
    patches = jnp.concatenate(cols, axis=-1)               # (n, ho, wo, kh*kw*c)
    return patches.reshape(n * ho * wo, kh * kw * c), (n, ho, wo)


def conv1x1(x, w, pre=None, post=None):
    n, h, ww, cin = x.shape
    cout = w.shape[-1]
    out = fused_matmul(x.reshape(n * h * ww, cin), w, pre=pre, post=post)
    return out.reshape(n, h, ww, cout)


def maxpool_3x3_s2_p1(x):
    return lax.reduce_window(
        x, jnp.array(-jnp.inf, x.dtype), lax.max,
        window_dimensions=(1, 3, 3, 1), window_strides=(1, 2, 2, 1),
        padding=((0, 0), (1, 1), (1, 1), (0, 0)))


# TODO(synk): fuse the 2x2 transition avg-pool into the transition matmul's
# epilogue (accumulate 4 output rows in VMEM before store).
def avgpool_2x2_s2(x):
    n, h, w, c = x.shape
    return (x.reshape(n, h // 2, 2, w // 2, 2, c).astype(jnp.float32)
            .mean(axis=(2, 4)).astype(x.dtype))


# ---------------------------------------------------------------------------
# Deterministic synthetic DenseNet-121 parameters
# ---------------------------------------------------------------------------
def make_params(key):
    counter = [0]

    def nk():
        counter[0] += 1
        return jax.random.fold_in(key, counter[0])

    def conv_w(*shape):
        fan_in = 1
        for d in shape[:-1]:
            fan_in *= d
        w = jax.random.normal(nk(), shape, jnp.float32) * jnp.sqrt(2.0 / fan_in)
        return w.astype(jnp.bfloat16)

    def bn(c):
        # eval-mode BN folded to (scale, bias); near-identity + small jitter
        scale = 1.0 + 0.05 * jax.random.normal(nk(), (1, c), jnp.float32)
        bias = 0.05 * jax.random.normal(nk(), (1, c), jnp.float32)
        return scale, bias

    p = {"conv0": conv_w(7, 7, 3, NUM_INIT_FEATURES),
         "bn0": bn(NUM_INIT_FEATURES)}
    num_features = NUM_INIT_FEATURES
    blocks = []
    for bi, n_layers in enumerate(BLOCK_CONFIG):
        layers = []
        for li in range(n_layers):
            cin = num_features + li * GROWTH_RATE
            layers.append({
                "bn1": bn(cin),
                "w1": conv_w(cin, BN_SIZE * GROWTH_RATE),              # 1x1
                "bn2": bn(BN_SIZE * GROWTH_RATE),
                "w2": conv_w(3, 3, BN_SIZE * GROWTH_RATE, GROWTH_RATE),
            })
        num_features += n_layers * GROWTH_RATE
        block = {"layers": layers}
        if bi != len(BLOCK_CONFIG) - 1:
            block["trans_bn"] = bn(num_features)
            block["trans_w"] = conv_w(num_features, num_features // 2)  # 1x1
            num_features //= 2
        blocks.append(block)
    p["blocks"] = blocks
    p["bn5"] = bn(num_features)
    p["out_features"] = num_features           # == 1024 == classifier.in_features
    return p


# ---------------------------------------------------------------------------
# denseFc forward
# ---------------------------------------------------------------------------
def dense_fc_forward(x_nchw, p):
    x = jnp.transpose(x_nchw, (0, 2, 3, 1)).astype(jnp.bfloat16)  # NCHW->NHWC

    # stem: conv0 (7x7 s2 p3) with norm0+relu0 fused as the matmul post-op,
    # then pool0
    patches, (n, ho, wo) = _im2col(x, 7, 7, 2, 3)
    y = fused_matmul(patches, p["conv0"].reshape(49 * 3, NUM_INIT_FEATURES),
                     post=p["bn0"])
    x = y.reshape(n, ho, wo, NUM_INIT_FEATURES)
    x = maxpool_3x3_s2_p1(x)

    # dense blocks + transitions
    # TODO(synk): write each layer's 32 new channels into a preallocated
    # channel-packed buffer via input_output_aliases instead of jnp.concatenate.
    for block in p["blocks"]:
        for lp in block["layers"]:
            # bn1+relu (pre-op) -> 1x1 bottleneck -> bn2+relu (post-op)
            h = conv1x1(x, lp["w1"], pre=lp["bn1"], post=lp["bn2"])
            # 3x3 growth conv, direct (no im2col)
            h = conv3x3_direct(h, lp["w2"])
            x = jnp.concatenate([x, h], axis=-1)
        if "trans_w" in block:
            # transition: bn+relu fused as the 1x1 conv's pre-op, then 2x2 pool
            x = conv1x1(x, block["trans_w"], pre=block["trans_bn"])
            x = avgpool_2x2_s2(x)

    # norm5 + F.relu + adaptive_avg_pool2d((1,1)) + flatten  (fused kernel)
    return bn_relu_global_avg_pool(x, *p["bn5"])


if __name__ == "__main__":
    key = jax.random.PRNGKey(0)
    # small, shape-consistent input: batch=2, 3 channels (DenseNet stem),
    # 64x64 spatial so every transition AvgPool2d stays valid.
    x = jax.random.normal(key, (2, 3, 64, 64), jnp.float32)   # NCHW, as PyTorch

    params = make_params(jax.random.PRNGKey(42))
    out = dense_fc_forward(x, params)
    out = jax.block_until_ready(out)

    assert out.shape == (2, params["out_features"]), out.shape   # (2, 1024)
    assert bool(jnp.all(jnp.isfinite(out)))
    print("KERNEL_OK")
</pallas_src>

<mosaic_0001>
module attributes {stable_mosaic.version = 11 : i64} {
  func.func @kernel(%arg0: i32, %arg1: i32, %arg2: i32, %arg3: memref<256x147xbf16, #tpu.memory_space<vmem>>, %arg4: memref<147x128xbf16, #tpu.memory_space<vmem>>, %arg5: memref<1x128xf32, #tpu.memory_space<vmem>>, %arg6: memref<1x128xf32, #tpu.memory_space<vmem>>, %arg7: memref<256x128xbf16, #tpu.memory_space<vmem>>, %arg8: memref<256x128xf32, #tpu.memory_space<vmem>>) attributes {dimension_semantics = [#tpu.dimension_semantics<parallel>, #tpu.dimension_semantics<parallel>, #tpu.dimension_semantics<arbitrary>], iteration_bounds = array<i64: 8, 1, 1>, scalar_prefetch = 0 : i64, scratch_operands = 1 : i64, tpu.core_type = #tpu.core_type<tc>, window_params = [{transform_indices = @transform_0, window_bounds = array<i64: 256, 147>}, {transform_indices = @transform_1, window_bounds = array<i64: 147, 128>}, {transform_indices = @transform_2, window_bounds = array<i64: 1, 128>}, {transform_indices = @transform_3, window_bounds = array<i64: 1, 128>}, {transform_indices = @transform_4, window_bounds = array<i64: 256, 128>}]} {
    %c0_i32 = arith.constant 0 : i32
    %0 = arith.cmpi eq, %arg2, %c0_i32 : i32
    %1 = arith.extui %0 : i1 to i32
    %c0_i32_0 = arith.constant 0 : i32
    %2 = arith.cmpi ne, %1, %c0_i32_0 : i32
    scf.if %2 {
      %cst_10 = arith.constant 0.000000e+00 : f32
      %12 = vector.broadcast %cst_10 : f32 to vector<256x128xf32>
      %c0_11 = arith.constant 0 : index
      %c0_12 = arith.constant 0 : index
      %13 = vector.load %arg8[%c0_11, %c0_12] : memref<256x128xf32, #tpu.memory_space<vmem>>, vector<256x128xf32>
      tpu.vector_store %arg8[%c0_11, %c0_12], %12 {strides = array<i32>} : memref<256x128xf32, #tpu.memory_space<vmem>>, vector<256x128xf32>,
    } else {
    }
    %c0 = arith.constant 0 : index
    %c0_1 = arith.constant 0 : index
    %3 = vector.load %arg3[%c0, %c0_1] : memref<256x147xbf16, #tpu.memory_space<vmem>>, vector<256x147xbf16>
    %c0_2 = arith.constant 0 : index
    %c0_3 = arith.constant 0 : index
    %4 = vector.load %arg8[%c0_2, %c0_3] : memref<256x128xf32, #tpu.memory_space<vmem>>, vector<256x128xf32>
    %c0_4 = arith.constant 0 : index
    %c0_5 = arith.constant 0 : index
    %5 = vector.load %arg4[%c0_4, %c0_5] : memref<147x128xbf16, #tpu.memory_space<vmem>>, vector<147x128xbf16>
    %cst = arith.constant dense<0.000000e+00> : vector<256x128xf32>
    %6 = tpu.matmul %3, %5, %cst {dimension_numbers = #tpu.dot_dimension_numbers<[1], [0], [0], [1], [0, 0, 1, 1], [], []>} : vector<256x147xbf16>, vector<147x128xbf16>, vector<256x128xf32> -> vector<256x128xf32>
    %7 = arith.addf %4, %6 : vector<256x128xf32>
    %c0_6 = arith.constant 0 : index
    %c0_7 = arith.constant 0 : index
    %8 = vector.load %arg8[%c0_6, %c0_7] : memref<256x128xf32, #tpu.memory_space<vmem>>, vector<256x128xf32>
    tpu.vector_store %arg8[%c0_6, %c0_7], %7 {strides = array<i32>} : memref<256x128xf32, #tpu.memory_space<vmem>>, vector<256x128xf32>,
    %c0_i32_8 = arith.constant 0 : i32
    %9 = arith.cmpi eq, %arg2, %c0_i32_8 : i32
    %10 = arith.extui %9 : i1 to i32
    %c0_i32_9 = arith.constant 0 : i32
    %11 = arith.cmpi ne, %10, %c0_i32_9 : i32
    scf.if %11 {
      %c0_10 = arith.constant 0 : index
      %c0_11 = arith.constant 0 : index
      %12 = vector.load %arg8[%c0_10, %c0_11] : memref<256x128xf32, #tpu.memory_space<vmem>>, vector<256x128xf32>
      %c0_12 = arith.constant 0 : index
      %c0_13 = arith.constant 0 : index
      %13 = vector.load %arg5[%c0_12, %c0_13] : memref<1x128xf32, #tpu.memory_space<vmem>>, vector<1x128xf32>
      %14 = vector.broadcast %13 : vector<1x128xf32> to vector<256x128xf32>
      %15 = arith.mulf %12, %14 : vector<256x128xf32>
      %c0_14 = arith.constant 0 : index
      %c0_15 = arith.constant 0 : index
      %16 = vector.load %arg6[%c0_14, %c0_15] : memref<1x128xf32, #tpu.memory_space<vmem>>, vector<1x128xf32>
      %17 = vector.broadcast %16 : vector<1x128xf32> to vector<256x128xf32>
      %18 = arith.addf %15, %17 : vector<256x128xf32>
      %cst_16 = arith.constant 0.000000e+00 : f32
      %19 = vector.broadcast %cst_16 : f32 to vector<256x128xf32>
      %20 = arith.maximumf %18, %19 : vector<256x128xf32>
      %21 = arith.truncf %20 : vector<256x128xf32> to vector<256x128xbf16>
      %c0_17 = arith.constant 0 : index
      %c0_18 = arith.constant 0 : index
      %22 = vector.load %arg7[%c0_17, %c0_18] : memref<256x128xbf16, #tpu.memory_space<vmem>>, vector<256x128xbf16>
      tpu.vector_store %arg7[%c0_17, %c0_18], %21 {strides = array<i32>} : memref<256x128xbf16, #tpu.memory_space<vmem>>, vector<256x128xbf16>,
    } else {
    }
    return
  }
  func.func @transform_0(%arg0: i32, %arg1: i32, %arg2: i32) -> (i32, i32) {
    %c0_i32 = arith.constant 0 : i32
    return %arg0, %arg2 : i32, i32
  }
  func.func @transform_1(%arg0: i32, %arg1: i32, %arg2: i32) -> (i32, i32) {
    %c0_i32 = arith.constant 0 : i32
    return %arg2, %arg1 : i32, i32
  }
  func.func @transform_2(%arg0: i32, %arg1: i32, %arg2: i32) -> (i32, i32) {
    %c0_i32 = arith.constant 0 : i32
    %c0_i32_0 = arith.constant 0 : i32
    return %c0_i32, %arg1 : i32, i32
  }
  func.func @transform_3(%arg0: i32, %arg1: i32, %arg2: i32) -> (i32, i32) {
    %c0_i32 = arith.constant 0 : i32
    %c0_i32_0 = arith.constant 0 : i32
    return %c0_i32, %arg1 : i32, i32
  }
  func.func @transform_4(%arg0: i32, %arg1: i32, %arg2: i32) -> (i32, i32) {
    %c0_i32 = arith.constant 0 : i32
    return %arg0, %arg1 : i32, i32
  }
}

</mosaic_0001>

<llo_original>
// kernel: tpu_custom_call.1
$region0: #{tpu_custom_call.1}
  #allocation0 [shape = 'u32[]', space=smem, size = 0x4, offset = 0x4, fixed_abs, tag = 'smem constant byte address 0x4 - core index']
  #allocation1 [shape = 'u32[72,128]{1,0:T(1,128)}', space=vmem, size = 0x9000, scoped, tag = 'internal scratch']
  #allocation2 [shape = 'f32[256,128]{1,0:T(8,128)}', space=vmem, size = 0x20000, scoped, tag = 'scratch operand']
  %s0 = inlined_call_operand.vmem [shape: bf16[2048,147], index: 0, kind: input, shape index: {}]
  %s1 = inlined_call_operand.vmem [shape: bf16[147,128], index: 1, kind: input, shape index: {}]
  %s2 = inlined_call_operand.vmem [shape: f32[1,128], index: 2, kind: input, shape index: {}]
  %s3 = inlined_call_operand.vmem [shape: f32[1,128], index: 3, kind: input, shape index: {}]
  %s4 = inlined_call_operand.hbm [shape: bf16[2048,128], index: 4, kind: output, shape index: {}]
  %s5 = sld [smem:[#allocation0]]
  $region57: #{tpu_custom_call.1} parent=0
    _
  %s7 = ssub.s32 1, %s5
  %s8 = scalar_select 0, %s7, %s5
  $region1: #{tpu_custom_call.1} parent=0
    #allocation3 [shape = 'u8[131072]{0}', space=vmem, size = 0x20000, scoped, tag = 'output window, operand 0']
    #allocation4 [shape = 's32[2]{0}', space=sflag, size = 0x8, scoped, tag = 'scoped memory for tpu_custom_call.1']
    %9 = vsyncpa [#allocation4], 0
    %s10 = scalar_lea.sflag [#allocation4], 1
    %11 = vsyncpa %s10, 0
    loop: start=0, step=1, limit=10
    $region2: #{tpu_custom_call.1} parent=1 // loop_pre_header
      _
    $region3: #{tpu_custom_call.1} parent=1 // loop_header
      %s13 = sphi 0, %s17
      %p14 = scmp.ge.s32.totalorder %s13, 10
      %s20 = sphi 0, %s39
      %s21 = sphi 0, %s35
      %s22 = sphi 0, %s31
      %s23 = sphi 0, %s20
      %s24 = sphi 0, %s21
      %s25 = sphi 0, %s22
      %s26 = sphi 0, %s23
      %s27 = sphi 0, %s24
      %s28 = sphi 0, %s25
      %s44 = sphi 0, %s46
      %s47 = sphi 0, %s44
      %s48 = sphi 0, %s47
      %s64 = sphi 0, %s48
      %s72 = sphi 0, %s74
      %s75 = sphi 0, %s72
      %s76 = sphi 0, %s75
      %s92 = sphi 0, %s76
      %s98 = sphi 0, %s100
      %s101 = sphi 0, %s98
      %s102 = sphi 0, %s101
      %s118 = sphi 0, %s102
      %s124 = sphi 0, %s126
      %s127 = sphi 0, %s124
      %s128 = sphi 0, %s127
      %s144 = sphi 0, %s128
      %s152 = sphi 0, %s154
      %s155 = sphi 0, %s152
      %s156 = sphi 0, %s155
      %s172 = sphi 0, %s156
    $region4: #{tpu_custom_call.1} parent=1 // loop_header_branch
      %16 = sbr.rel (%p14) target = $region8
    $region5: #{tpu_custom_call.1} parent=1 // loop_body
      %s18 = ssub.s32 %s13, 1
      %s19 = ssub.s32 %s13, 2
      %s29 = sadd.s32 1, %s22
      %p30 = scmp.ge.s32.totalorder %s29, 1
      %s31 = scalar_select %p30, 0, %s29
      %s32 = sadd.s32 1, %s21
      %s33 = scalar_select %p30, %s32, %s21
      %p34 = scmp.ge.s32.totalorder %s33, 1
      %s35 = scalar_select %p34, 0, %s33
      %s36 = sadd.s32 1, %s20
      %s37 = scalar_select %p34, %s36, %s20
      %p38 = scmp.ge.s32.totalorder %s37, 8
      %s39 = scalar_select %p38, 0, %s37
      %s40 = ssub.s32 %s20, %s39
      %s41 = ssub.s32 %s22, %s31
      %s42 = sor.u32 %s40, %s41
      %p43 = scmp.eq.s32.totalorder %s42, 0
      %s45 = sadd.s32 %s44, 1
      %s46 = scalar_select %p43, %s44, %s45
      %p49 = pneg %p43
      %p50 = scmp.eq.s32.totalorder %s13, 7
      %p51 = por %p49, %p50
      %p52 = scmp.ne.s32.totalorder %s44, %s47
      %p53 = scmp.eq.s32.totalorder %s13, 0
      %p54 = por %p52, %p53
      %p55 = scmp.ne.s32.totalorder %s44, %s47
      %p56 = scmp.eq.s32.totalorder %s18, 7
      %p57 = por %p55, %p56
      %p58 = scmp.ne.s32.totalorder %s47, %s48
      %p59 = scmp.eq.s32.totalorder %s18, 0
      %p60 = por %p58, %p59
      %p61 = scmp.ne.s32.totalorder %s47, %s48
      %p62 = scmp.eq.s32.totalorder %s19, 7
      %p63 = por %p61, %p62
      %p65 = scmp.ne.s32.totalorder %s48, %s64
      %p66 = scmp.eq.s32.totalorder %s19, 0
      %p67 = por %p65, %p66
      %s68 = ssub.s32 %s22, %s31
      %s69 = ssub.s32 %s21, %s35
      %s70 = sor.u32 %s68, %s69
      %p71 = scmp.eq.s32.totalorder %s70, 0
      %s73 = sadd.s32 %s72, 1
      %s74 = scalar_select %p71, %s72, %s73
      %p77 = pneg %p71
      %p78 = scmp.eq.s32.totalorder %s13, 7
      %p79 = por %p77, %p78
      %p80 = scmp.ne.s32.totalorder %s72, %s75
      %p81 = scmp.eq.s32.totalorder %s13, 0
      %p82 = por %p80, %p81
      %p83 = scmp.ne.s32.totalorder %s72, %s75
      %p84 = scmp.eq.s32.totalorder %s18, 7
      %p85 = por %p83, %p84
      %p86 = scmp.ne.s32.totalorder %s75, %s76
      %p87 = scmp.eq.s32.totalorder %s18, 0
      %p88 = por %p86, %p87
      %p89 = scmp.ne.s32.totalorder %s75, %s76
      %p90 = scmp.eq.s32.totalorder %s19, 7
      %p91 = por %p89, %p90
      %p93 = scmp.ne.s32.totalorder %s76, %s92
      %p94 = scmp.eq.s32.totalorder %s19, 0
      %p95 = por %p93, %p94
      %s96 = ssub.s32 %s21, %s35
      %p97 = scmp.eq.s32.totalorder %s96, 0
      %s99 = sadd.s32 %s98, 1
      %s100 = scalar_select %p97, %s98, %s99
      %p103 = pneg %p97
      %p104 = scmp.eq.s32.totalorder %s13, 7
      %p105 = por %p103, %p104
      %p106 = scmp.ne.s32.totalorder %s98, %s101
      %p107 = scmp.eq.s32.totalorder %s13, 0
      %p108 = por %p106, %p107
      %p109 = scmp.ne.s32.totalorder %s98, %s101
      %p110 = scmp.eq.s32.totalorder %s18, 7
      %p111 = por %p109, %p110
      %p112 = scmp.ne.s32.totalorder %s101, %s102
      %p113 = scmp.eq.s32.totalorder %s18, 0
      %p114 = por %p112, %p113
      %p115 = scmp.ne.s32.totalorder %s101, %s102
      %p116 = scmp.eq.s32.totalorder %s19, 7
      %p117 = por %p115, %p116
      %p119 = scmp.ne.s32.totalorder %s102, %s118
      %p120 = scmp.eq.s32.totalorder %s19, 0
      %p121 = por %p119, %p120
      %s122 = ssub.s32 %s21, %s35
      %p123 = scmp.eq.s32.totalorder %s122, 0
      %s125 = sadd.s32 %s124, 1
      %s126 = scalar_select %p123, %s124, %s125
      %p129 = pneg %p123
      %p130 = scmp.eq.s32.totalorder %s13, 7
      %p131 = por %p129, %p130
      %p132 = scmp.ne.s32.totalorder %s124, %s127
      %p133 = scmp.eq.s32.totalorder %s13, 0
      %p134 = por %p132, %p133
      %p135 = scmp.ne.s32.totalorder %s124, %s127
      %p136 = scmp.eq.s32.totalorder %s18, 7
      %p137 = por %p135, %p136
      %p138 = scmp.ne.s32.totalorder %s127, %s128
      %p139 = scmp.eq.s32.totalorder %s18, 0
      %p140 = por %p138, %p139
      %p141 = scmp.ne.s32.totalorder %s127, %s128
      %p142 = scmp.eq.s32.totalorder %s19, 7
      %p143 = por %p141, %p142
      %p145 = scmp.ne.s32.totalorder %s128, %s144
      %p146 = scmp.eq.s32.totalorder %s19, 0
      %p147 = por %p145, %p146
      %s148 = ssub.s32 %s20, %s39
      %s149 = ssub.s32 %s21, %s35
      %s150 = sor.u32 %s148, %s149
      %p151 = scmp.eq.s32.totalorder %s150, 0
      %s153 = sadd.s32 %s152, 1
      %s154 = scalar_select %p151, %s152, %s153
      %p157 = pneg %p151
      %p158 = scmp.eq.s32.totalorder %s13, 7
      %p159 = por %p157, %p158
      %p160 = scmp.ne.s32.totalorder %s152, %s155
      %p161 = scmp.eq.s32.totalorder %s13, 0
      %p162 = por %p160, %p161
      %p163 = scmp.ne.s32.totalorder %s152, %s155
      %p164 = scmp.eq.s32.totalorder %s18, 7
      %p165 = por %p163, %p164
      %p166 = scmp.ne.s32.totalorder %s155, %s156
      %p167 = scmp.eq.s32.totalorder %s18, 0
      %p168 = por %p166, %p167
      %p169 = scmp.ne.s32.totalorder %s155, %s156
      %p170 = scmp.eq.s32.totalorder %s19, 7
      %p171 = por %p169, %p170
      %p173 = scmp.ne.s32.totalorder %s156, %s172
      %p174 = scmp.eq.s32.totalorder %s19, 0
      %p175 = por %p173, %p174
      %p176 = scmp.le.s32.totalorder 1, %s13
      %p177 = scmp.lt.s32.totalorder %s13, 9
      %p178 = pnand %p176, %p177
      %p179 = pneg %p178
      // Predicated region
      $region9: #{tpu_custom_call.1} parent=5 // pred_check
        _
      $region10: #{tpu_custom_call.1} parent=5 // pred_check_branch
        %181 = sbr.rel (%p178) target = $region12
      $region11: #{tpu_custom_call.1} parent=5 // pred_region
        %s182 = ssub.s32 %s13, 1
        // Predicated region
        $region13: #{tpu_custom_call.1} parent=11 // pred_check
          %p183 = pneg %p88
        $region14: #{tpu_custom_call.1} parent=11 // pred_check_branch
          %185 = sbr.rel (%p183) target = $region16
        $region15: #{tpu_custom_call.1} parent=11 // pred_region
          %s186 = smul.u32 19, %s25
          %p187 = scmp.lt.s32.totalorder %s186, 18
          %s188 = scalar_select %p187, %s186, 18
          %p189 = scmp.lt.s32.totalorder %s24, 0
          %s190 = scalar_select %p189, %s24, 0
          %s191 = sadd.s32 %s190, %s188
          %s192 = smul.addr %s191, 4
          %s193 = scalar_lea.vmem %s1, %s192
          %s194 = smul.u32 19, %s25
        $region16: #{tpu_custom_call.1} parent=11 // pred_fallthru
          _
        // Predicated region
        $region17: #{tpu_custom_call.1} parent=11 // pred_check
          %p195 = pneg %p114
        $region18: #{tpu_custom_call.1} parent=11 // pred_check_branch
          %197 = sbr.rel (%p195) target = $region20
        $region19: #{tpu_custom_call.1} parent=11 // pred_region
          %p198 = scmp.lt.s32.totalorder %s24, 0
          %s199 = scalar_select %p198, %s24, 0
          %s200 = scalar_lea.vmem %s2, %s199
        $region20: #{tpu_custom_call.1} parent=11 // pred_fallthru
          _
        // Predicated region
        $region21: #{tpu_custom_call.1} parent=11 // pred_check
          %p201 = pneg %p140
        $region22: #{tpu_custom_call.1} parent=11 // pred_check_branch
          %203 = sbr.rel (%p201) target = $region24
        $region23: #{tpu_custom_call.1} parent=11 // pred_region
          %p204 = scmp.lt.s32.totalorder %s24, 0
          %s205 = scalar_select %p204, %s24, 0
          %s206 = scalar_lea.vmem %s3, %s205
        $region24: #{tpu_custom_call.1} parent=11 // pred_fallthru
          _
      $region12: #{tpu_custom_call.1} parent=5 // pred_fallthru
        _
      %p207 = scmp.lt.s32.totalorder %s13, 8
      // Predicated region
      $region25: #{tpu_custom_call.1} parent=5 // pred_check
        %p208 = pneg %p207
      $region26: #{tpu_custom_call.1} parent=5 // pred_check_branch
        %210 = sbr.rel (%p208) target = $region28
      $region27: #{tpu_custom_call.1} parent=5 // pred_region
        // Predicated region
        $region29: #{tpu_custom_call.1} parent=27 // pred_check
          %p211 = pneg %p54
        $region30: #{tpu_custom_call.1} parent=27 // pred_check_branch
          %213 = sbr.rel (%p211) target = $region32
        $region31: #{tpu_custom_call.1} parent=27 // pred_region
          %s214 = smul.u32 32, %s20
          %s215 = smul.u32 2, %s22
          %p216 = scmp.lt.s32.totalorder %s214, 255
          %s217 = scalar_select %p216, %s214, 255
          %p218 = scmp.lt.s32.totalorder %s215, 1
          %s219 = scalar_select %p218, %s215, 1
          %s220 = smul.addr %s217, 2
          %s221 = sadd.s32 %s219, %s220
          %s222 = smul.addr %s221, 4
          %s223 = scalar_lea.vmem %s0, %s222
          %s224 = smul.u32 32, %s20
          %s225 = smul.u32 2, %s22
        $region32: #{tpu_custom_call.1} parent=27 // pred_fallthru
          _
      $region28: #{tpu_custom_call.1} parent=5 // pred_fallthru
        _
      %p226 = scmp.le.s32.totalorder 1, %s13
      %p227 = scmp.lt.s32.totalorder %s13, 9
      %p228 = pnand %p226, %p227
      %p229 = pneg %p228
      // Predicated region
      $region33: #{tpu_custom_call.1} parent=5 // pred_check
        _
      $region34: #{tpu_custom_call.1} parent=5 // pred_check_branch
        %231 = sbr.rel (%p228) target = $region36
      $region35: #{tpu_custom_call.1} parent=5 // pred_region
        %s232 = ssub.s32 %s13, 1
        %s233 = smul.u32 32, %s23
        %s234 = smul.u32 2, %s25
        %p235 = scmp.lt.s32.totalorder %s233, 255
        %s236 = scalar_select %p235, %s233, 255
        %p237 = scmp.lt.s32.totalorder %s234, 1
        %s238 = scalar_select %p237, %s234, 1
        %s239 = smul.addr %s236, 2
        %s240 = sadd.s32 %s238, %s239
        %s241 = smul.addr %s240, 4
        %s242 = scalar_lea.vmem %s0, %s241
        %p243 = pneg %p60
        %p244 = pneg %p57
        %s245 = smul.u32 19, %s25
        %p246 = scmp.lt.s32.totalorder %s245, 18
        %s247 = scalar_select %p246, %s245, 18
        %p248 = scmp.lt.s32.totalorder %s24, 0
        %s249 = scalar_select %p248, %s24, 0
        %s250 = sadd.s32 %s249, %s247
        %s251 = smul.addr %s250, 4
        %s252 = scalar_lea.vmem %s1, %s251
        %p253 = pneg %p88
        %p254 = pneg %p85
        %p255 = scmp.lt.s32.totalorder %s24, 0
        %s256 = scalar_select %p255, %s24, 0
        %s257 = scalar_lea.vmem %s2, %s256
        %p258 = pneg %p114
        %p259 = pneg %p111
        %p260 = scmp.lt.s32.totalorder %s24, 0
        %s261 = scalar_select %p260, %s24, 0
        %s262 = scalar_lea.vmem %s3, %s261
        %p263 = pneg %p140
        %p264 = pneg %p137
        %p265 = pneg %p168
        %p266 = pneg %p165
        %s267 = sand.u32 %s155, 1
        %s268 = scalar_lea.sflag [#allocation4], %s267
        %s269 = sand.u32 %s155, 1
        %s270 = smul.addr %s269, 128
        %s271 = scalar_lea.vmem [#allocation3], %s270
        %s272 = smul.u32 32, %s23
        %s273 = smul.u32 2, %s25
        %p274 = scmp.lt.s32.totalorder %s272, 255
        %s275 = scalar_select %p274, %s272, 255
        %p276 = scmp.lt.s32.totalorder %s273, 1
        %s277 = scalar_select %p276, %s273, 1
        %s278 = smul.addr %s275, 2
        %s279 = sadd.s32 %s277, %s278
        %s280 = smul.addr %s279, 4
        %s281 = scalar_lea.vmem %s0, %s280
        %s282 = smul.u32 32, %s23
        %s283 = smul.u32 2, %s25
        %s284 = smul.u32 19, %s25
        %p285 = scmp.lt.s32.totalorder %s284, 18
        %s286 = scalar_select %p285, %s284, 18
        %p287 = scmp.lt.s32.totalorder %s24, 0
        %s288 = scalar_select %p287, %s24, 0
        %s289 = sadd.s32 %s288, %s286
        %s290 = smul.addr %s289, 4
        %s291 = scalar_lea.vmem %s1, %s290
        %s292 = smul.u32 19, %s25
        %p293 = scmp.lt.s32.totalorder %s24, 0
        %s294 = scalar_select %p293, %s24, 0
        %s295 = scalar_lea.vmem %s2, %s294
        %p296 = scmp.lt.s32.totalorder %s24, 0
        %s297 = scalar_select %p296, %s24, 0
        %s298 = scalar_lea.vmem %s3, %s297
        %s299 = smul.u32 32, %s23
        %p301 = scmp.eq.s32.totalorder %s25, 0
        // Predicated region
        $region37: #{tpu_custom_call.1} parent=35 // pred_check
          %p302 = pneg %p301
        $region38: #{tpu_custom_call.1} parent=35 // pred_check_branch
          %304 = sbr.rel (%p302) target = $region40
        $region39: #{tpu_custom_call.1} parent=35 // pred_region
          %305 = vst [vmem:[#allocation2] sm:$0xff] 0.0
          %306 = vst [vmem:[#allocation2 + $0x8] sm:$0xff] 0.0
          %307 = vst [vmem:[#allocation2 + $0x10] sm:$0xff] 0.0
          %308 = vst [vmem:[#allocation2 + $0x18] sm:$0xff] 0.0
          %309 = vst [vmem:[#allocation2 + $0x20] sm:$0xff] 0.0
          %310 = vst [vmem:[#allocation2 + $0x28] sm:$0xff] 0.0
          %311 = vst [vmem:[#allocation2 + $0x30] sm:$0xff] 0.0
          %312 = vst [vmem:[#allocation2 + $0x38] sm:$0xff] 0.0
          %313 = vst [vmem:[#allocation2 + $0x40] sm:$0xff] 0.0
          %314 = vst [vmem:[#allocation2 + $0x48] sm:$0xff] 0.0
          %315 = vst [vmem:[#allocation2 + $0x50] sm:$0xff] 0.0
          %316 = vst [vmem:[#allocation2 + $0x58] sm:$0xff] 0.0
          %317 = vst [vmem:[#allocation2 + $0x60] sm:$0xff] 0.0
          %318 = vst [vmem:[#allocation2 + $0x68] sm:$0xff] 0.0
          %319 = vst [vmem:[#allocation2 + $0x70] sm:$0xff] 0.0
          %320 = vst [vmem:[#allocation2 + $0x78] sm:$0xff] 0.0
          %321 = vst [vmem:[#allocation2 + $0x80] sm:$0xff] 0.0
          %322 = vst [vmem:[#allocation2 + $0x88] sm:$0xff] 0.0
          %323 = vst [vmem:[#allocation2 + $0x90] sm:$0xff] 0.0
          %324 = vst [vmem:[#allocation2 + $0x98] sm:$0xff] 0.0
          %325 = vst [vmem:[#allocation2 + $0xa0] sm:$0xff] 0.0
          %326 = vst [vmem:[#allocation2 + $0xa8] sm:$0xff] 0.0
          %327 = vst [vmem:[#allocation2 + $0xb0] sm:$0xff] 0.0
          %328 = vst [vmem:[#allocation2 + $0xb8] sm:$0xff] 0.0
          %329 = vst [vmem:[#allocation2 + $0xc0] sm:$0xff] 0.0
          %330 = vst [vmem:[#allocation2 + $0xc8] sm:$0xff] 0.0
          %331 = vst [vmem:[#allocation2 + $0xd0] sm:$0xff] 0.0
          %332 = vst [vmem:[#allocation2 + $0xd8] sm:$0xff] 0.0
          %333 = vst [vmem:[#allocation2 + $0xe0] sm:$0xff] 0.0
          %334 = vst [vmem:[#allocation2 + $0xe8] sm:$0xff] 0.0
          %335 = vst [vmem:[#allocation2 + $0xf0] sm:$0xff] 0.0
          %336 = vst [vmem:[#allocation2 + $0xf8] sm:$0xff] 0.0
        $region40: #{tpu_custom_call.1} parent=35 // pred_fallthru
          _
        %v337 = vld [vmem:[%s281] sm:$0xff]
        %v338 = vld [vmem:[%s281 + $0x8] sm:$0xff]
        %v339 = vld [vmem:[%s281 + $0x10] sm:$0xff]
        %v340 = vld [vmem:[%s281 + $0x18] sm:$0xff]
        %v341 = vld [vmem:[%s281 + $0x20] sm:$0xff]
        %v342 = vld [vmem:[%s281 + $0x28] sm:$0xff]
        %v343 = vld [vmem:[%s281 + $0x30] sm:$0xff]
        %v344 = vld [vmem:[%s281 + $0x38] sm:$0xff]
        %v345 = vld [vmem:[%s281 + $0x40] sm:$0xff]
        %v346 = vld [vmem:[%s281 + $0x48] sm:$0xff]
        %v347 = vld [vmem:[%s281 + $0x50] sm:$0xff]
        %v348 = vld [vmem:[%s281 + $0x58] sm:$0xff]
        %v349 = vld [vmem:[%s281 + $0x60] sm:$0xff]
        %v350 = vld [vmem:[%s281 + $0x68] sm:$0xff]
        %v351 = vld [vmem:[%s281 + $0x70] sm:$0xff]
        %v352 = vld [vmem:[%s281 + $0x78] sm:$0xff]
        %v353 = vld [vmem:[%s281 + $0x80] sm:$0xff]
        %v354 = vld [vmem:[%s281 + $0x88] sm:$0xff]
        %v355 = vld [vmem:[%s281 + $0x90] sm:$0xff]
        %v356 = vld [vmem:[%s281 + $0x98] sm:$0xff]
        %v357 = vld [vmem:[%s281 + $0xa0] sm:$0xff]
        %v358 = vld [vmem:[%s281 + $0xa8] sm:$0xff]
        %v359 = vld [vmem:[%s281 + $0xb0] sm:$0xff]
        %v360 = vld [vmem:[%s281 + $0xb8] sm:$0xff]
        %v361 = vld [vmem:[%s281 + $0xc0] sm:$0xff]
        %v362 = vld [vmem:[%s281 + $0xc8] sm:$0xff]
        %v363 = vld [vmem:[%s281 + $0xd0] sm:$0xff]
        %v364 = vld [vmem:[%s281 + $0xd8] sm:$0xff]
        %v365 = vld [vmem:[%s281 + $0xe0] sm:$0xff]
        %v366 = vld [vmem:[%s281 + $0xe8] sm:$0xff]
        %v367 = vld [vmem:[%s281 + $0xf0] sm:$0xff]
        %v368 = vld [vmem:[%s281 + $0xf8] sm:$0xff]
        %v369 = vld [vmem:[#allocation2] sm:$0xff]
        %v370 = vld [vmem:[#allocation2 + $0x8] sm:$0xff]
        %v371 = vld [vmem:[#allocation2 + $0x10] sm:$0xff]
        %v372 = vld [vmem:[#allocation2 + $0x18] sm:$0xff]
        %v373 = vld [vmem:[#allocation2 + $0x20] sm:$0xff]
        %v374 = vld [vmem:[#allocation2 + $0x28] sm:$0xff]
        %v375 = vld [vmem:[#allocation2 + $0x30] sm:$0xff]
        %v376 = vld [vmem:[#allocation2 + $0x38] sm:$0xff]
        %v377 = vld [vmem:[#allocation2 + $0x40] sm:$0xff]
        %v378 = vld [vmem:[#allocation2 + $0x48] sm:$0xff]
        %v379 = vld [vmem:[#allocation2 + $0x50] sm:$0xff]
        %v380 = vld [vmem:[#allocation2 + $0x58] sm:$0xff]
        %v381 = vld [vmem:[#allocation2 + $0x60] sm:$0xff]
        %v382 = vld [vmem:[#allocation2 + $0x68] sm:$0xff]
        %v383 = vld [vmem:[#allocation2 + $0x70] sm:$0xff]
        %v384 = vld [vmem:[#allocation2 + $0x78] sm:$0xff]
        %v385 = vld [vmem:[#allocation2 + $0x80] sm:$0xff]
        %v386 = vld [vmem:[#allocation2 + $0x88] sm:$0xff]
        %v387 = vld [vmem:[#allocation2 + $0x90] sm:$0xff]
        %v388 = vld [vmem:[#allocation2 + $0x98] sm:$0xff]
        %v389 = vld [vmem:[#allocation2 + $0xa0] sm:$0xff]
        %v390 = vld [vmem:[#allocation2 + $0xa8] sm:$0xff]
        %v391 = vld [vmem:[#allocation2 + $0xb0] sm:$0xff]
        %v392 = vld [vmem:[#allocation2 + $0xb8] sm:$0xff]
        %v393 = vld [vmem:[#allocation2 + $0xc0] sm:$0xff]
        %v394 = vld [vmem:[#allocation2 + $0xc8] sm:$0xff]
        %v395 = vld [vmem:[#allocation2 + $0xd0] sm:$0xff]
        %v396 = vld [vmem:[#allocation2 + $0xd8] sm:$0xff]
        %v397 = vld [vmem:[#allocation2 + $0xe0] sm:$0xff]
        %v398 = vld [vmem:[#allocation2 + $0xe8] sm:$0xff]
        %v399 = vld [vmem:[#allocation2 + $0xf0] sm:$0xff]
        %v400 = vld [vmem:[#allocation2 + $0xf8] sm:$0xff]
        %v401 = vld [vmem:[%s291] sm:$0xf]
        %v402 = vld [vmem:[%s291 + $0x4] sm:$0xf]
        %v403 = vld [vmem:[%s291 + $0x8] sm:$0xf]
        %v404 = vld [vmem:[%s291 + $0xc] sm:$0xf]
        %v405 = vld [vmem:[%s291 + $0x10] sm:$0xf]
        %v406 = vld [vmem:[%s291 + $0x14] sm:$0xf]
        %v407 = vld [vmem:[%s291 + $0x18] sm:$0xf]
        %v408 = vld [vmem:[%s291 + $0x1c] sm:$0xf]
        %v409 = vld [vmem:[%s291 + $0x20] sm:$0xf]
        %v410 = vld [vmem:[%s291 + $0x24] sm:$0xf]
        %v411 = vld [vmem:[%s291 + $0x28] sm:$0xf]
        %v412 = vld [vmem:[%s291 + $0x2c] sm:$0xf]
        %v413 = vld [vmem:[%s291 + $0x30] sm:$0xf]
        %v414 = vld [vmem:[%s291 + $0x34] sm:$0xf]
        %v415 = vld [vmem:[%s291 + $0x38] sm:$0xf]
        %v416 = vld [vmem:[%s291 + $0x3c] sm:$0xf]
        %v417 = vld [vmem:[%s291 + $0x40] sm:$0xf]
        %v418 = vld [vmem:[%s291 + $0x44] sm:$0xf]
        %v419 = vld [vmem:[%s291 + $0x48] sm:$0x3]
        %v452 = vunpack.c.l.b16 %v337
        %v453 = vunpack.c.h.b16 %v337
        %v454 = vunpack.c.l.b16 %v338
        %v455 = vunpack.c.h.b16 %v338
        %v456 = vunpack.c.l.b16 %v339
        %v457 = vunpack.c.h.b16 %v339
        %v458 = vunpack.c.l.b16 %v340
        %v459 = vunpack.c.h.b16 %v340
        %v460 = vunpack.c.l.b16 %v341
        %v461 = vunpack.c.h.b16 %v341
        %v462 = vunpack.c.l.b16 %v342
        %v463 = vunpack.c.h.b16 %v342
        %v464 = vunpack.c.l.b16 %v343
        %v465 = vunpack.c.h.b16 %v343
        %v466 = vunpack.c.l.b16 %v344
        %v467 = vunpack.c.h.b16 %v344
        %v468 = vunpack.c.l.b16 %v345
        %v469 = vunpack.c.h.b16 %v345
        %v470 = vunpack.c.l.b16 %v346
        %v471 = vunpack.c.h.b16 %v346
        %v472 = vunpack.c.l.b16 %v347
        %v473 = vunpack.c.h.b16 %v347
        %v474 = vunpack.c.l.b16 %v348
        %v475 = vunpack.c.h.b16 %v348
        %v476 = vunpack.c.l.b16 %v349
        %v477 = vunpack.c.h.b16 %v349
        %v478 = vunpack.c.l.b16 %v350
        %v479 = vunpack.c.h.b16 %v350
        %v480 = vunpack.c.l.b16 %v351
        %v481 = vunpack.c.h.b16 %v351
        %v482 = vunpack.c.l.b16 %v352
        %v483 = vunpack.c.h.b16 %v352
        %v484 = vunpack.c.l.b16 %v353
        %v485 = vunpack.c.h.b16 %v353
        %v486 = vunpack.c.l.b16 %v354
        %v487 = vunpack.c.h.b16 %v354
        %v488 = vunpack.c.l.b16 %v355
        %v489 = vunpack.c.h.b16 %v355
        %v490 = vunpack.c.l.b16 %v356
        %v491 = vunpack.c.h.b16 %v356
        %v492 = vunpack.c.l.b16 %v357
        %v493 = vunpack.c.h.b16 %v357
        %v494 = vunpack.c.l.b16 %v358
        %v495 = vunpack.c.h.b16 %v358
        %v496 = vunpack.c.l.b16 %v359
        %v497 = vunpack.c.h.b16 %v359
        %v498 = vunpack.c.l.b16 %v360
        %v499 = vunpack.c.h.b16 %v360
        %v500 = vunpack.c.l.b16 %v361
        %v501 = vunpack.c.h.b16 %v361
        %v502 = vunpack.c.l.b16 %v362
        %v503 = vunpack.c.h.b16 %v362
        %v504 = vunpack.c.l.b16 %v363
        %v505 = vunpack.c.h.b16 %v363
        %v506 = vunpack.c.l.b16 %v364
        %v507 = vunpack.c.h.b16 %v364
        %v508 = vunpack.c.l.b16 %v365
        %v509 = vunpack.c.h.b16 %v365
        %v510 = vunpack.c.l.b16 %v366
        %v511 = vunpack.c.h.b16 %v366
        %v512 = vunpack.c.l.b16 %v367
        %v513 = vunpack.c.h.b16 %v367
        %v514 = vunpack.c.l.b16 %v368
        %v515 = vunpack.c.h.b16 %v368
        %v516 = vpack.c.b16 %v454, %v452
        %v517 = vpack.c.b16 %v455, %v453
        %v518 = vpack.c.b16 %v458, %v456
        %v519 = vpack.c.b16 %v459, %v457
        %v520 = vpack.c.b16 %v462, %v460
        %v521 = vpack.c.b16 %v463, %v461
        %v522 = vpack.c.b16 %v466, %v464
        %v523 = vpack.c.b16 %v467, %v465
        %v524 = vpack.c.b16 %v470, %v468
        %v525 = vpack.c.b16 %v471, %v469
        %v526 = vpack.c.b16 %v474, %v472
        %v527 = vpack.c.b16 %v475, %v473
        %v528 = vpack.c.b16 %v478, %v476
        %v529 = vpack.c.b16 %v479, %v477
        %v530 = vpack.c.b16 %v482, %v480
        %v531 = vpack.c.b16 %v483, %v481
        %v532 = vpack.c.b16 %v486, %v484
        %v533 = vpack.c.b16 %v487, %v485
        %v534 = vpack.c.b16 %v490, %v488
        %v535 = vpack.c.b16 %v491, %v489
        %v536 = vpack.c.b16 %v494, %v492
        %v537 = vpack.c.b16 %v495, %v493
        %v538 = vpack.c.b16 %v498, %v496
        %v539 = vpack.c.b16 %v499, %v497
        %v540 = vpack.c.b16 %v502, %v500
        %v541 = vpack.c.b16 %v503, %v501
        %v542 = vpack.c.b16 %v506, %v504
        %v543 = vpack.c.b16 %v507, %v505
        %v544 = vpack.c.b16 %v510, %v508
        %v545 = vpack.c.b16 %v511, %v509
        %v546 = vpack.c.b16 %v514, %v512
        %v547 = vpack.c.b16 %v515, %v513
        %v583 = vunpack.c.l.b16 %v401
        %v584 = vunpack.c.l.b16 %v402
        %v585 = vunpack.c.l.b16 %v403
        %v586 = vunpack.c.l.b16 %v404
        %v587 = vunpack.c.l.b16 %v405
        %v588 = vunpack.c.l.b16 %v406
        %v589 = vunpack.c.l.b16 %v407
        %v590 = vunpack.c.l.b16 %v408
        %v591 = vunpack.c.l.b16 %v409
        %v592 = vunpack.c.l.b16 %v410
        %v593 = vunpack.c.l.b16 %v411
        %v594 = vunpack.c.l.b16 %v412
        %v595 = vunpack.c.l.b16 %v413
        %v596 = vunpack.c.l.b16 %v414
        %v597 = vunpack.c.l.b16 %v415
        %v598 = vunpack.c.l.b16 %v416
        %v599 = vunpack.c.l.b16 %v417
        %v600 = vunpack.c.l.b16 %v418
        %v601 = vunpack.c.l.b16 %v419
        %v602 = vpack.c.b16 %v584, %v583
        %v603 = vpack.c.b16 %v586, %v585
        %v604 = vpack.c.b16 %v588, %v587
        %v605 = vpack.c.b16 %v590, %v589
        %v606 = vpack.c.b16 %v592, %v591
        %v607 = vpack.c.b16 %v594, %v593
        %v608 = vpack.c.b16 %v596, %v595
        %v609 = vpack.c.b16 %v598, %v597
        %v610 = vpack.c.b16 %v600, %v599
        %v611 = vpack.c.b16 %v601, %v601
        %vm621 = vcmask 154624
        %v623 = vsel %vm621, %v517, 0
        %v626 = vsel %vm621, %v519, 0
        %v629 = vsel %vm621, %v521, 0
        %v632 = vsel %vm621, %v523, 0
        %v635 = vsel %vm621, %v525, 0
        %v638 = vsel %vm621, %v527, 0
        %v641 = vsel %vm621, %v529, 0
        %v644 = vsel %vm621, %v531, 0
        %v647 = vsel %vm621, %v533, 0
        %v650 = vsel %vm621, %v535, 0
        %v653 = vsel %vm621, %v537, 0
        %v656 = vsel %vm621, %v539, 0
        %v659 = vsel %vm621, %v541, 0
        %v662 = vsel %vm621, %v543, 0
        %v665 = vsel %vm621, %v545, 0
        %v668 = vsel %vm621, %v547, 0
        %vm670 = vcmask 1040384
        %vm671 = vcmask 1041408
        %v672 = vsel %vm670, 4294967295, 65535
        %v673 = vsel %vm671, %v672, 0
        %v675 = vand.u32 %v611, %v673
        %677 = vmatpush.bf16.msra.mxu0 %v609
        %678 = vmatpush.bf16.msra.mxu0 %v608
        %679 = vmatpush.bf16.msra.mxu0 %v607
        %680 = vmatpush.bf16.msra.mxu0 %v606
        %681 = vmatpush.bf16.msra.mxu0 %v605
        %682 = vmatpush.bf16.msra.mxu0 %v604
        %683 = vmatpush.bf16.msra.mxu0 %v603
        %684 = vmatpush.bf16.msra.mxu0 %v602
        %685 = vmatmul.bf16.gmra.mxu0 %v516
        %v686 = vpop.f32.mrf.mxu0
        %v687 = vadd.f32 0.0, %v686
        %v688 = vpop.f32.mrf.mxu0
        %v689 = vadd.f32 0.0, %v688
        %690 = vmatmul.bf16.gmra.mxu0 %v518
        %v691 = vpop.f32.mrf.mxu0
        %v692 = vadd.f32 0.0, %v691
        %v693 = vpop.f32.mrf.mxu0
        %v694 = vadd.f32 0.0, %v693
        %695 = vmatmul.bf16.gmra.mxu0 %v520
        %v696 = vpop.f32.mrf.mxu0
        %v697 = vadd.f32 0.0, %v696
        %v698 = vpop.f32.mrf.mxu0
        %v699 = vadd.f32 0.0, %v698
        %700 = vmatmul.bf16.gmra.mxu0 %v522
        %v701 = vpop.f32.mrf.mxu0
        %v702 = vadd.f32 0.0, %v701
        %v703 = vpop.f32.mrf.mxu0
        %v704 = vadd.f32 0.0, %v703
        %705 = vmatmul.bf16.gmra.mxu0 %v524
        %v706 = vpop.f32.mrf.mxu0
        %v707 = vadd.f32 0.0, %v706
        %v708 = vpop.f32.mrf.mxu0
        %v709 = vadd.f32 0.0, %v708
        %710 = vmatmul.bf16.gmra.mxu0 %v526
        %v711 = vpop.f32.mrf.mxu0
        %v712 = vadd.f32 0.0, %v711
        %v713 = vpop.f32.mrf.mxu0
        %v714 = vadd.f32 0.0, %v713
        %715 = vmatmul.bf16.gmra.mxu0 %v528
        %v716 = vpop.f32.mrf.mxu0
        %v717 = vadd.f32 0.0, %v716
        %v718 = vpop.f32.mrf.mxu0
        %v719 = vadd.f32 0.0, %v718
        %720 = vmatmul.bf16.gmra.mxu0 %v530
        %v721 = vpop.f32.mrf.mxu0
        %v722 = vadd.f32 0.0, %v721
        %v723 = vpop.f32.mrf.mxu0
        %v724 = vadd.f32 0.0, %v723
        %725 = vmatmul.bf16.gmra.mxu0 %v532
        %v726 = vpop.f32.mrf.mxu0
        %v727 = vadd.f32 0.0, %v726
        %v728 = vpop.f32.mrf.mxu0
        %v729 = vadd.f32 0.0, %v728
        %730 = vmatmul.bf16.gmra.mxu0 %v534
        %v731 = vpop.f32.mrf.mxu0
        %v732 = vadd.f32 0.0, %v731
        %v733 = vpop.f32.mrf.mxu0
        %v734 = vadd.f32 0.0, %v733
        %735 = vmatmul.bf16.gmra.mxu0 %v536
        %v736 = vpop.f32.mrf.mxu0
        %v737 = vadd.f32 0.0, %v736
        %v738 = vpop.f32.mrf.mxu0
        %v739 = vadd.f32 0.0, %v738
        %740 = vmatmul.bf16.gmra.mxu0 %v538
        %v741 = vpop.f32.mrf.mxu0
        %v742 = vadd.f32 0.0, %v741
        %v743 = vpop.f32.mrf.mxu0
        %v744 = vadd.f32 0.0, %v743
        %745 = vmatmul.bf16.gmra.mxu0 %v540
        %v746 = vpop.f32.mrf.mxu0
        %v747 = vadd.f32 0.0, %v746
        %v748 = vpop.f32.mrf.mxu0
        %v749 = vadd.f32 0.0, %v748
        %750 = vmatmul.bf16.gmra.mxu0 %v542
        %v751 = vpop.f32.mrf.mxu0
        %v752 = vadd.f32 0.0, %v751
        %v753 = vpop.f32.mrf.mxu0
        %v754 = vadd.f32 0.0, %v753
        %755 = vmatmul.bf16.gmra.mxu0 %v544
        %v756 = vpop.f32.mrf.mxu0
        %v757 = vadd.f32 0.0, %v756
        %v758 = vpop.f32.mrf.mxu0
        %v759 = vadd.f32 0.0, %v758
        %760 = vmatmul.bf16.gmra.mxu0 %v546
        %v761 = vpop.f32.mrf.mxu0
        %v762 = vadd.f32 0.0, %v761
        %v763 = vpop.f32.mrf.mxu0
        %v764 = vadd.f32 0.0, %v763
        %765 = vdwg.mxu0
        %766 = vmatpush.bf16.msra.mxu0 0
        %767 = vmatpush.bf16.msra.mxu0 0
        %768 = vmatpush.bf16.msra.mxu0 0
        %769 = vmatpush.bf16.msra.mxu0 0
        %770 = vmatpush.bf16.msra.mxu0 0
        %771 = vmatpush.bf16.msra.mxu0 0
        %772 = vmatpush.bf16.msra.mxu0 %v675
        %773 = vmatpush.bf16.msra.mxu0 %v610
        %774 = vmatmul.bf16.gmra.mxu0 %v623
        %v775 = vpop.f32.mrf.mxu0
        %v776 = vadd.f32 %v687, %v775
        %v777 = vpop.f32.mrf.mxu0
        %v778 = vadd.f32 %v689, %v777
        %779 = vmatmul.bf16.gmra.mxu0 %v626
        %v780 = vpop.f32.mrf.mxu0
        %v781 = vadd.f32 %v692, %v780
        %v782 = vpop.f32.mrf.mxu0
        %v783 = vadd.f32 %v694, %v782
        %784 = vmatmul.bf16.gmra.mxu0 %v629
        %v785 = vpop.f32.mrf.mxu0
        %v786 = vadd.f32 %v697, %v785
        %v787 = vpop.f32.mrf.mxu0
        %v788 = vadd.f32 %v699, %v787
        %789 = vmatmul.bf16.gmra.mxu0 %v632
        %v790 = vpop.f32.mrf.mxu0
        %v791 = vadd.f32 %v702, %v790
        %v792 = vpop.f32.mrf.mxu0
        %v793 = vadd.f32 %v704, %v792
        %794 = vmatmul.bf16.gmra.mxu0 %v635
        %v795 = vpop.f32.mrf.mxu0
        %v796 = vadd.f32 %v707, %v795
        %v797 = vpop.f32.mrf.mxu0
        %v798 = vadd.f32 %v709, %v797
        %799 = vmatmul.bf16.gmra.mxu0 %v638
        %v800 = vpop.f32.mrf.mxu0
        %v801 = vadd.f32 %v712, %v800
        %v802 = vpop.f32.mrf.mxu0
        %v803 = vadd.f32 %v714, %v802
        %804 = vmatmul.bf16.gmra.mxu0 %v641
        %v805 = vpop.f32.mrf.mxu0
        %v806 = vadd.f32 %v717, %v805
        %v807 = vpop.f32.mrf.mxu0
        %v808 = vadd.f32 %v719, %v807
        %809 = vmatmul.bf16.gmra.mxu0 %v644
        %v810 = vpop.f32.mrf.mxu0
        %v811 = vadd.f32 %v722, %v810
        %v812 = vpop.f32.mrf.mxu0
        %v813 = vadd.f32 %v724, %v812
        %814 = vmatmul.bf16.gmra.mxu0 %v647
        %v815 = vpop.f32.mrf.mxu0
        %v816 = vadd.f32 %v727, %v815
        %v817 = vpop.f32.mrf.mxu0
        %v818 = vadd.f32 %v729, %v817
        %819 = vmatmul.bf16.gmra.mxu0 %v650
        %v820 = vpop.f32.mrf.mxu0
        %v821 = vadd.f32 %v732, %v820
        %v822 = vpop.f32.mrf.mxu0
        %v823 = vadd.f32 %v734, %v822
        %824 = vmatmul.bf16.gmra.mxu0 %v653
        %v825 = vpop.f32.mrf.mxu0
        %v826 = vadd.f32 %v737, %v825
        %v827 = vpop.f32.mrf.mxu0
        %v828 = vadd.f32 %v739, %v827
        %829 = vmatmul.bf16.gmra.mxu0 %v656
        %v830 = vpop.f32.mrf.mxu0
        %v831 = vadd.f32 %v742, %v830
        %v832 = vpop.f32.mrf.mxu0
        %v833 = vadd.f32 %v744, %v832
        %834 = vmatmul.bf16.gmra.mxu0 %v659
        %v835 = vpop.f32.mrf.mxu0
        %v836 = vadd.f32 %v747, %v835
        %v837 = vpop.f32.mrf.mxu0
        %v838 = vadd.f32 %v749, %v837
        %839 = vmatmul.bf16.gmra.mxu0 %v662
        %v840 = vpop.f32.mrf.mxu0
        %v841 = vadd.f32 %v752, %v840
        %v842 = vpop.f32.mrf.mxu0
        %v843 = vadd.f32 %v754, %v842
        %844 = vmatmul.bf16.gmra.mxu0 %v665
        %v845 = vpop.f32.mrf.mxu0
        %v846 = vadd.f32 %v757, %v845
        %v847 = vpop.f32.mrf.mxu0
        %v848 = vadd.f32 %v759, %v847
        %849 = vmatmul.bf16.gmra.mxu0 %v668
        %v850 = vpop.f32.mrf.mxu0
        %v851 = vadd.f32 %v762, %v850
        %v852 = vpop.f32.mrf.mxu0
        %v853 = vadd.f32 %v764, %v852
        %854 = vdwg.mxu0
        %v855 = vadd.f32 %v369, %v776
        %v856 = vadd.f32 %v370, %v778
        %v857 = vadd.f32 %v371, %v781
        %v858 = vadd.f32 %v372, %v783
        %v859 = vadd.f32 %v373, %v786
        %v860 = vadd.f32 %v374, %v788
        %v861 = vadd.f32 %v375, %v791
        %v862 = vadd.f32 %v376, %v793
        %v863 = vadd.f32 %v377, %v796
        %v864 = vadd.f32 %v378, %v798
        %v865 = vadd.f32 %v379, %v801
        %v866 = vadd.f32 %v380, %v803
        %v867 = vadd.f32 %v381, %v806
        %v868 = vadd.f32 %v382, %v808
        %v869 = vadd.f32 %v383, %v811
        %v870 = vadd.f32 %v384, %v813
        %v871 = vadd.f32 %v385, %v816
        %v872 = vadd.f32 %v386, %v818
        %v873 = vadd.f32 %v387, %v821
        %v874 = vadd.f32 %v388, %v823
        %v875 = vadd.f32 %v389, %v826
        %v876 = vadd.f32 %v390, %v828
        %v877 = vadd.f32 %v391, %v831
        %v878 = vadd.f32 %v392, %v833
        %v879 = vadd.f32 %v393, %v836
        %v880 = vadd.f32 %v394, %v838
        %v881 = vadd.f32 %v395, %v841
        %v882 = vadd.f32 %v396, %v843
        %v883 = vadd.f32 %v397, %v846
        %v884 = vadd.f32 %v398, %v848
        %v885 = vadd.f32 %v399, %v851
        %v886 = vadd.f32 %v400, %v853
        %887 = vst [vmem:[#allocation2] sm:$0xff] %v855
        %888 = vst [vmem:[#allocation2 + $0x8] sm:$0xff] %v856
        %889 = vst [vmem:[#allocation2 + $0x10] sm:$0xff] %v857
        %890 = vst [vmem:[#allocation2 + $0x18] sm:$0xff] %v858
        %891 = vst [vmem:[#allocation2 + $0x20] sm:$0xff] %v859
        %892 = vst [vmem:[#allocation2 + $0x28] sm:$0xff] %v860
        %893 = vst [vmem:[#allocation2 + $0x30] sm:$0xff] %v861
        %894 = vst [vmem:[#allocation2 + $0x38] sm:$0xff] %v862
        %895 = vst [vmem:[#allocation2 + $0x40] sm:$0xff] %v863
        %896 = vst [vmem:[#allocation2 + $0x48] sm:$0xff] %v864
        %897 = vst [vmem:[#allocation2 + $0x50] sm:$0xff] %v865
        %898 = vst [vmem:[#allocation2 + $0x58] sm:$0xff] %v866
        %899 = vst [vmem:[#allocation2 + $0x60] sm:$0xff] %v867
        %900 = vst [vmem:[#allocation2 + $0x68] sm:$0xff] %v868
        %901 = vst [vmem:[#allocation2 + $0x70] sm:$0xff] %v869
        %902 = vst [vmem:[#allocation2 + $0x78] sm:$0xff] %v870
        %903 = vst [vmem:[#allocation2 + $0x80] sm:$0xff] %v871
        %904 = vst [vmem:[#allocation2 + $0x88] sm:$0xff] %v872
        %905 = vst [vmem:[#allocation2 + $0x90] sm:$0xff] %v873
        %906 = vst [vmem:[#allocation2 + $0x98] sm:$0xff] %v874
        %907 = vst [vmem:[#allocation2 + $0xa0] sm:$0xff] %v875
        %908 = vst [vmem:[#allocation2 + $0xa8] sm:$0xff] %v876
        %909 = vst [vmem:[#allocation2 + $0xb0] sm:$0xff] %v877
        %910 = vst [vmem:[#allocation2 + $0xb8] sm:$0xff] %v878
        %911 = vst [vmem:[#allocation2 + $0xc0] sm:$0xff] %v879
        %912 = vst [vmem:[#allocation2 + $0xc8] sm:$0xff] %v880
        %913 = vst [vmem:[#allocation2 + $0xd0] sm:$0xff] %v881
        %914 = vst [vmem:[#allocation2 + $0xd8] sm:$0xff] %v882
        %915 = vst [vmem:[#allocation2 + $0xe0] sm:$0xff] %v883
        %916 = vst [vmem:[#allocation2 + $0xe8] sm:$0xff] %v884
        %917 = vst [vmem:[#allocation2 + $0xf0] sm:$0xff] %v885
        %918 = vst [vmem:[#allocation2 + $0xf8] sm:$0xff] %v886
        // Predicated region
        $region41: #{tpu_custom_call.1} parent=35 // pred_check
          %p919 = pneg %p301
        $region42: #{tpu_custom_call.1} parent=35 // pred_check_branch
          %921 = sbr.rel (%p919) target = $region44
        $region43: #{tpu_custom_call.1} parent=35 // pred_region
          %v922 = vld [vmem:[#allocation2] sm:$0xff]
          %v923 = vld [vmem:[#allocation2 + $0x8] sm:$0xff]
          %v924 = vld [vmem:[#allocation2 + $0x10] sm:$0xff]
          %v925 = vld [vmem:[#allocation2 + $0x18] sm:$0xff]
          %v926 = vld [vmem:[#allocation2 + $0x20] sm:$0xff]
          %v927 = vld [vmem:[#allocation2 + $0x28] sm:$0xff]
          %v928 = vld [vmem:[#allocation2 + $0x30] sm:$0xff]
          %v929 = vld [vmem:[#allocation2 + $0x38] sm:$0xff]
          %v930 = vld [vmem:[#allocation2 + $0x40] sm:$0xff]
          %v931 = vld [vmem:[#allocation2 + $0x48] sm:$0xff]
          %v932 = vld [vmem:[#allocation2 + $0x50] sm:$0xff]
          %v933 = vld [vmem:[#allocation2 + $0x58] sm:$0xff]
          %v934 = vld [vmem:[#allocation2 + $0x60] sm:$0xff]
          %v935 = vld [vmem:[#allocation2 + $0x68] sm:$0xff]
          %v936 = vld [vmem:[#allocation2 + $0x70] sm:$0xff]
          %v937 = vld [vmem:[#allocation2 + $0x78] sm:$0xff]
          %v938 = vld [vmem:[#allocation2 + $0x80] sm:$0xff]
          %v939 = vld [vmem:[#allocation2 + $0x88] sm:$0xff]
          %v940 = vld [vmem:[#allocation2 + $0x90] sm:$0xff]
          %v941 = vld [vmem:[#allocation2 + $0x98] sm:$0xff]
          %v942 = vld [vmem:[#allocation2 + $0xa0] sm:$0xff]
          %v943 = vld [vmem:[#allocation2 + $0xa8] sm:$0xff]
          %v944 = vld [vmem:[#allocation2 + $0xb0] sm:$0xff]
          %v945 = vld [vmem:[#allocation2 + $0xb8] sm:$0xff]
          %v946 = vld [vmem:[#allocation2 + $0xc0] sm:$0xff]
          %v947 = vld [vmem:[#allocation2 + $0xc8] sm:$0xff]
          %v948 = vld [vmem:[#allocation2 + $0xd0] sm:$0xff]
          %v949 = vld [vmem:[#allocation2 + $0xd8] sm:$0xff]
          %v950 = vld [vmem:[#allocation2 + $0xe0] sm:$0xff]
          %v951 = vld [vmem:[#allocation2 + $0xe8] sm:$0xff]
          %v952 = vld [vmem:[#allocation2 + $0xf0] sm:$0xff]
          %v953 = vld [vmem:[#allocation2 + $0xf8] sm:$0xff]
          %v954 = vld [vmem:[%s295] sm:$0x1]
          %v956 = vperm.slane %v954, 0
          %v958 = vmul.f32 %v922, %v956
          %v959 = vmul.f32 %v923, %v956
          %v960 = vmul.f32 %v924, %v956
          %v961 = vmul.f32 %v925, %v956
          %v962 = vmul.f32 %v926, %v956
          %v963 = vmul.f32 %v927, %v956
          %v964 = vmul.f32 %v928, %v956
          %v965 = vmul.f32 %v929, %v956
          %v966 = vmul.f32 %v930, %v956
          %v967 = vmul.f32 %v931, %v956
          %v968 = vmul.f32 %v932, %v956
          %v969 = vmul.f32 %v933, %v956
          %v970 = vmul.f32 %v934, %v956
          %v971 = vmul.f32 %v935, %v956
          %v972 = vmul.f32 %v936, %v956
          %v973 = vmul.f32 %v937, %v956
          %v974 = vmul.f32 %v938, %v956
          %v975 = vmul.f32 %v939, %v956
          %v976 = vmul.f32 %v940, %v956
          %v977 = vmul.f32 %v941, %v956
          %v978 = vmul.f32 %v942, %v956
          %v979 = vmul.f32 %v943, %v956
          %v980 = vmul.f32 %v944, %v956
          %v981 = vmul.f32 %v945, %v956
          %v982 = vmul.f32 %v946, %v956
          %v983 = vmul.f32 %v947, %v956
          %v984 = vmul.f32 %v948, %v956
          %v985 = vmul.f32 %v949, %v956
          %v986 = vmul.f32 %v950, %v956
          %v987 = vmul.f32 %v951, %v956
          %v988 = vmul.f32 %v952, %v956
          %v989 = vmul.f32 %v953, %v956
          %v990 = vld [vmem:[%s298] sm:$0x1]
          %v992 = vperm.slane %v990, 0
          %v994 = vadd.f32 %v958, %v992
          %v995 = vadd.f32 %v959, %v992
          %v996 = vadd.f32 %v960, %v992
          %v997 = vadd.f32 %v961, %v992
          %v998 = vadd.f32 %v962, %v992
          %v999 = vadd.f32 %v963, %v992
          %v1000 = vadd.f32 %v964, %v992
          %v1001 = vadd.f32 %v965, %v992
          %v1002 = vadd.f32 %v966, %v992
          %v1003 = vadd.f32 %v967, %v992
          %v1004 = vadd.f32 %v968, %v992
          %v1005 = vadd.f32 %v969, %v992
          %v1006 = vadd.f32 %v970, %v992
          %v1007 = vadd.f32 %v971, %v992
          %v1008 = vadd.f32 %v972, %v992
          %v1009 = vadd.f32 %v973, %v992
          %v1010 = vadd.f32 %v974, %v992
          %v1011 = vadd.f32 %v975, %v992
          %v1012 = vadd.f32 %v976, %v992
          %v1013 = vadd.f32 %v977, %v992
          %v1014 = vadd.f32 %v978, %v992
          %v1015 = vadd.f32 %v979, %v992
          %v1016 = vadd.f32 %v980, %v992
          %v1017 = vadd.f32 %v981, %v992
          %v1018 = vadd.f32 %v982, %v992
          %v1019 = vadd.f32 %v983, %v992
          %v1020 = vadd.f32 %v984, %v992
          %v1021 = vadd.f32 %v985, %v992
          %v1022 = vadd.f32 %v986, %v992
          %v1023 = vadd.f32 %v987, %v992
          %v1024 = vadd.f32 %v988, %v992
          %v1025 = vadd.f32 %v989, %v992
          %v1026 = vmax.f32 %v994, 0.0
          %v1027 = vmax.f32 %v995, 0.0
          %v1028 = vmax.f32 %v996, 0.0
          %v1029 = vmax.f32 %v997, 0.0
          %v1030 = vmax.f32 %v998, 0.0
          %v1031 = vmax.f32 %v999, 0.0
          %v1032 = vmax.f32 %v1000, 0.0
          %v1033 = vmax.f32 %v1001, 0.0
          %v1034 = vmax.f32 %v1002, 0.0
          %v1035 = vmax.f32 %v1003, 0.0
          %v1036 = vmax.f32 %v1004, 0.0
          %v1037 = vmax.f32 %v1005, 0.0
          %v1038 = vmax.f32 %v1006, 0.0
          %v1039 = vmax.f32 %v1007, 0.0
          %v1040 = vmax.f32 %v1008, 0.0
          %v1041 = vmax.f32 %v1009, 0.0
          %v1042 = vmax.f32 %v1010, 0.0
          %v1043 = vmax.f32 %v1011, 0.0
          %v1044 = vmax.f32 %v1012, 0.0
          %v1045 = vmax.f32 %v1013, 0.0
          %v1046 = vmax.f32 %v1014, 0.0
          %v1047 = vmax.f32 %v1015, 0.0
          %v1048 = vmax.f32 %v1016, 0.0
          %v1049 = vmax.f32 %v1017, 0.0
          %v1050 = vmax.f32 %v1018, 0.0
          %v1051 = vmax.f32 %v1019, 0.0
          %v1052 = vmax.f32 %v1020, 0.0
          %v1053 = vmax.f32 %v1021, 0.0
          %v1054 = vmax.f32 %v1022, 0.0
          %v1055 = vmax.f32 %v1023, 0.0
          %v1056 = vmax.f32 %v1024, 0.0
          %v1057 = vmax.f32 %v1025, 0.0
          %v1058 = vpack.c.bf16 %v1026, %v1026
          %v1059 = vpack.c.bf16 %v1027, %v1027
          %v1060 = vpack.c.bf16 %v1028, %v1028
          %v1061 = vpack.c.bf16 %v1029, %v1029
          %v1062 = vpack.c.bf16 %v1030, %v1030
          %v1063 = vpack.c.bf16 %v1031, %v1031
          %v1064 = vpack.c.bf16 %v1032, %v1032
          %v1065 = vpack.c.bf16 %v1033, %v1033
          %v1066 = vpack.c.bf16 %v1034, %v1034
          %v1067 = vpack.c.bf16 %v1035, %v1035
          %v1068 = vpack.c.bf16 %v1036, %v1036
          %v1069 = vpack.c.bf16 %v1037, %v1037
          %v1070 = vpack.c.bf16 %v1038, %v1038
          %v1071 = vpack.c.bf16 %v1039, %v1039
          %v1072 = vpack.c.bf16 %v1040, %v1040
          %v1073 = vpack.c.bf16 %v1041, %v1041
          %v1074 = vpack.c.bf16 %v1042, %v1042
          %v1075 = vpack.c.bf16 %v1043, %v1043
          %v1076 = vpack.c.bf16 %v1044, %v1044
          %v1077 = vpack.c.bf16 %v1045, %v1045
          %v1078 = vpack.c.bf16 %v1046, %v1046
          %v1079 = vpack.c.bf16 %v1047, %v1047
          %v1080 = vpack.c.bf16 %v1048, %v1048
          %v1081 = vpack.c.bf16 %v1049, %v1049
          %v1082 = vpack.c.bf16 %v1050, %v1050
          %v1083 = vpack.c.bf16 %v1051, %v1051
          %v1084 = vpack.c.bf16 %v1052, %v1052
          %v1085 = vpack.c.bf16 %v1053, %v1053
          %v1086 = vpack.c.bf16 %v1054, %v1054
          %v1087 = vpack.c.bf16 %v1055, %v1055
          %v1088 = vpack.c.bf16 %v1056, %v1056
          %v1089 = vpack.c.bf16 %v1057, %v1057
          %1090 = vst [vmem:[%s271] sm:$0xf] %v1058
          %1091 = vst [vmem:[%s271 + $0x4] sm:$0xf] %v1059
          %1092 = vst [vmem:[%s271 + $0x8] sm:$0xf] %v1060
          %1093 = vst [vmem:[%s271 + $0xc] sm:$0xf] %v1061
          %1094 = vst [vmem:[%s271 + $0x10] sm:$0xf] %v1062
          %1095 = vst [vmem:[%s271 + $0x14] sm:$0xf] %v1063
          %1096 = vst [vmem:[%s271 + $0x18] sm:$0xf] %v1064
          %1097 = vst [vmem:[%s271 + $0x1c] sm:$0xf] %v1065
          %1098 = vst [vmem:[%s271 + $0x20] sm:$0xf] %v1066
          %1099 = vst [vmem:[%s271 + $0x24] sm:$0xf] %v1067
          %1100 = vst [vmem:[%s271 + $0x28] sm:$0xf] %v1068
          %1101 = vst [vmem:[%s271 + $0x2c] sm:$0xf] %v1069
          %1102 = vst [vmem:[%s271 + $0x30] sm:$0xf] %v1070
          %1103 = vst [vmem:[%s271 + $0x34] sm:$0xf] %v1071
          %1104 = vst [vmem:[%s271 + $0x38] sm:$0xf] %v1072
          %1105 = vst [vmem:[%s271 + $0x3c] sm:$0xf] %v1073
          %1106 = vst [vmem:[%s271 + $0x40] sm:$0xf] %v1074
          %1107 = vst [vmem:[%s271 + $0x44] sm:$0xf] %v1075
          %1108 = vst [vmem:[%s271 + $0x48] sm:$0xf] %v1076
          %1109 = vst [vmem:[%s271 + $0x4c] sm:$0xf] %v1077
          %1110 = vst [vmem:[%s271 + $0x50] sm:$0xf] %v1078
          %1111 = vst [vmem:[%s271 + $0x54] sm:$0xf] %v1079
          %1112 = vst [vmem:[%s271 + $0x58] sm:$0xf] %v1080
          %1113 = vst [vmem:[%s271 + $0x5c] sm:$0xf] %v1081
          %1114 = vst [vmem:[%s271 + $0x60] sm:$0xf] %v1082
          %1115 = vst [vmem:[%s271 + $0x64] sm:$0xf] %v1083
          %1116 = vst [vmem:[%s271 + $0x68] sm:$0xf] %v1084
          %1117 = vst [vmem:[%s271 + $0x6c] sm:$0xf] %v1085
          %1118 = vst [vmem:[%s271 + $0x70] sm:$0xf] %v1086
          %1119 = vst [vmem:[%s271 + $0x74] sm:$0xf] %v1087
          %1120 = vst [vmem:[%s271 + $0x78] sm:$0xf] %v1088
          %1121 = vst [vmem:[%s271 + $0x7c] sm:$0xf] %v1089
        $region44: #{tpu_custom_call.1} parent=35 // pred_fallthru
          _
        %s1122 = sand.u32 %s155, 1
        %s1123 = scalar_lea.sflag [#allocation4], %s1122
        %s1124 = sand.u32 %s155, 1
        %s1125 = smul.addr %s1124, 128
        %s1126 = scalar_lea.vmem [#allocation3], %s1125
        // Predicated region
        $region45: #{tpu_custom_call.1} parent=35 // pred_check
          %p1127 = pneg %p165
        $region46: #{tpu_custom_call.1} parent=35 // pred_check_branch
          %1129 = sbr.rel (%p1127) target = $region48
        $region47: #{tpu_custom_call.1} parent=35 // pred_region
          %s1130 = smul.u32 32, %s23
          %1132 = vsyncadd %s1123, 0
          %s1133 = sadd.s32 %s24, %s1130
          %s1134 = smul.addr %s1133, 4
          %s1135 = scalar_lea.hbm %s4, %s1134
          %s1136 = sshll.u32 %s1126, 4
          %s1137 = int_to_ptr.vmem [resolvable:$true] %s1136
          %s1138 = sshll.u32 %s1135, 4
          %s1139 = int_to_ptr.hbm [resolvable:$true] %s1138
          %1144 = dma.vmem_to_hbm [thread:$0]  %s1137, 2048, %s1139, %s1123, 64, 64, 4
        $region48: #{tpu_custom_call.1} parent=35 // pred_fallthru
          _
      $region36: #{tpu_custom_call.1} parent=5 // pred_fallthru
        _
      %p1145 = scmp.le.s32.totalorder 2, %s13
      // Predicated region
      $region49: #{tpu_custom_call.1} parent=5 // pred_check
        %p1146 = pneg %p1145
      $region50: #{tpu_custom_call.1} parent=5 // pred_check_branch
        %1148 = sbr.rel (%p1146) target = $region52
      $region51: #{tpu_custom_call.1} parent=5 // pred_region
        %s1149 = ssub.s32 %s13, 2
        // Predicated region
        $region53: #{tpu_custom_call.1} parent=51 // pred_check
          %p1150 = pneg %p171
        $region54: #{tpu_custom_call.1} parent=51 // pred_check_branch
          %1152 = sbr.rel (%p1150) target = $region56
        $region55: #{tpu_custom_call.1} parent=51 // pred_region
          %s1153 = sand.u32 %s156, 1
          %s1154 = scalar_lea.sflag [#allocation4], %s1153
          %s1155 = sand.u32 %s156, 1
          %s1156 = smul.addr %s1155, 128
          %s1157 = scalar_lea.vmem [#allocation3], %s1156
          %1159 = dma.done %s1154, 2048
        $region56: #{tpu_custom_call.1} parent=51 // pred_fallthru
          _
      $region52: #{tpu_custom_call.1} parent=5 // pred_fallthru
        _
    $region6: #{tpu_custom_call.1} parent=1 // loop_footer
      %s17 = sadd.s32 1, %s13
    $region7: #{tpu_custom_call.1} parent=1 // loop_footer_branch
      %12 = sbr.rel target = $region3
    $region8: #{tpu_custom_call.1} parent=1 // loop_exit
      _
    %1160 = vsyncpa [#allocation4], 1
    %s1161 = scalar_lea.sflag [#allocation4], 1
    %1162 = vsyncpa %s1161, 1

</llo_original>
